<compile_context>
chip_gen: v6e
topology: v6e:2x2x1
jax: 0.10.0
libtpu: 0.0.40
codegen_flags: <defaults>
</compile_context>

<pallas_src>
import jax
import jax.numpy as jnp
from jax.experimental import pallas as pl
from jax.experimental.pallas import tpu as pltpu


def _model_loss_kernel(x_ref, w_ref, loss_ref):
    # x_ref: (B, F+2) f32 = [features | 1 | label]   w_ref: (C=2, F+2) f32
    # loss_ref: (1, 1) f32 in SMEM
    x = x_ref[...]
    B = x.shape[0]
    FP = x.shape[1]

    # Label column (exact f32 representation of {0, 1}); cheap static lane slice.
    lab = x[:, FP - 1:FP]                                         # (B, 1)

    # Linear layer (bias folded in via the ones column; label column is
    # zeroed in w_packed).  VPU broadcast-multiply + XLU cross-lane reduce.
    z0 = jnp.sum(x * w_ref[0:1, :], axis=1, keepdims=True)        # (B, 1)
    z1 = jnp.sum(x * w_ref[1:2, :], axis=1, keepdims=True)        # (B, 1)

    # Dropout(0.1): eval-mode identity (deterministic).
    # TODO(synk): training-mode stochastic dropout not wired in.

    # 2-class log-softmax + NLL(mean), fused:
    #   logp_c = z_c - lse  =>  loss = mean(lse - z_label)
    m = jnp.maximum(z0, z1)
    lse = m + jnp.log(jnp.exp(z0 - m) + jnp.exp(z1 - m))          # (B, 1)
    picked = jnp.where(lab < 0.5, z0, z1)                         # (B, 1)
    loss_ref[0, 0] = jnp.sum(lse - picked) * (1.0 / B)


def model_loss(input_ids, weight, bias, labels):
    """input_ids: (B, F) f32, weight: (C, F) f32 (torch layout),
    bias: (C,) f32, labels: (B,) int.  Returns scalar f32 loss."""
    B, F = input_ids.shape
    C = weight.shape[0]
    assert C == 2, "kernel is specialized for the 2-class head of this Model"

    # One-time packing so the kernel sees exactly two DMA payloads.
    ones = jnp.ones((B, 1), jnp.float32)
    lab_f = labels.astype(jnp.float32).reshape(B, 1)
    x_packed = jnp.concatenate([input_ids.astype(jnp.float32), ones, lab_f],
                               axis=1)                            # (B, F+2)
    w_packed = jnp.concatenate(
        [weight.astype(jnp.float32), bias.reshape(C, 1).astype(jnp.float32),
         jnp.zeros((C, 1), jnp.float32)], axis=1)                 # (C, F+2)

    loss = pl.pallas_call(
        _model_loss_kernel,
        out_shape=jax.ShapeDtypeStruct((1, 1), jnp.float32),
        in_specs=[
            pl.BlockSpec(memory_space=pltpu.VMEM),   # x_packed, full array
            pl.BlockSpec(memory_space=pltpu.VMEM),   # w_packed, full array
        ],
        out_specs=pl.BlockSpec(memory_space=pltpu.SMEM),
    )(x_packed, w_packed)
    return loss[0, 0]


def reference_loss(input_ids, weight, bias, labels):
    z = input_ids @ weight.T + bias[None, :]
    logp = jax.nn.log_softmax(z, axis=1)
    return -jnp.mean(jnp.take_along_axis(logp, labels[:, None], axis=1))


if __name__ == "__main__":
    B, F, C = 8, 10, 2
    key = jax.random.PRNGKey(0)
    k_x, k_w, k_b, k_l = jax.random.split(key, 4)

    # Deterministic parameter init (matches nn.Linear(10, 2) shapes/layout).
    bound = 1.0 / (F ** 0.5)
    weight = jax.random.uniform(k_w, (C, F), jnp.float32, -bound, bound)
    bias = jax.random.uniform(k_b, (C,), jnp.float32, -bound, bound)

    input_ids = jax.random.normal(k_x, (B, F), jnp.float32)
    labels = jax.random.randint(k_l, (B,), 0, C, jnp.int32)

    loss = model_loss(input_ids, weight, bias, labels)
    jax.block_until_ready(loss)

    ref = reference_loss(input_ids, weight, bias, labels)
    assert jnp.allclose(loss, ref, atol=1e-5, rtol=1e-5), (loss, ref)

    print("KERNEL_OK")
</pallas_src>

<mosaic_0001>
module attributes {stable_mosaic.version = 11 : i64} {
  func.func @_model_loss_kernel(%arg0: memref<8x12xf32, #tpu.memory_space<vmem>>, %arg1: memref<2x12xf32, #tpu.memory_space<vmem>>, %arg2: memref<1x1xf32, #tpu.memory_space<smem>>) attributes {dimension_semantics = [], scalar_prefetch = 0 : i64, scratch_operands = 0 : i64, tpu.core_type = #tpu.core_type<tc>} {
    %c0 = arith.constant 0 : index
    %c0_0 = arith.constant 0 : index
    %0 = vector.load %arg0[%c0, %c0_0] : memref<8x12xf32, #tpu.memory_space<vmem>>, vector<8x12xf32>
    %1 = vector.extract_strided_slice %0 {offsets = [0, 11], sizes = [8, 1], strides = [1, 1]} : vector<8x12xf32> to vector<8x1xf32>
    %c0_1 = arith.constant 0 : index
    %c0_2 = arith.constant 0 : index
    %2 = vector.load %arg1[%c0_1, %c0_2] : memref<2x12xf32, #tpu.memory_space<vmem>>, vector<1x12xf32>
    %3 = vector.broadcast %2 : vector<1x12xf32> to vector<8x12xf32>
    %4 = arith.mulf %0, %3 : vector<8x12xf32>
    %cst = arith.constant dense<0.000000e+00> : vector<8xf32>
    %5 = vector.multi_reduction <add>, %4, %cst [1] : vector<8x12xf32> to vector<8xf32>
    %6 = vector.shape_cast %5 : vector<8xf32> to vector<8x1xf32>
    %c1 = arith.constant 1 : index
    %c0_3 = arith.constant 0 : index
    %7 = vector.load %arg1[%c1, %c0_3] : memref<2x12xf32, #tpu.memory_space<vmem>>, vector<1x12xf32>
    %8 = vector.broadcast %7 : vector<1x12xf32> to vector<8x12xf32>
    %9 = arith.mulf %0, %8 : vector<8x12xf32>
    %cst_4 = arith.constant dense<0.000000e+00> : vector<8xf32>
    %10 = vector.multi_reduction <add>, %9, %cst_4 [1] : vector<8x12xf32> to vector<8xf32>
    %11 = vector.shape_cast %10 : vector<8xf32> to vector<8x1xf32>
    %12 = arith.maximumf %6, %11 : vector<8x1xf32>
    %13 = arith.subf %6, %12 : vector<8x1xf32>
    %14 = math.exp %13 : vector<8x1xf32>
    %15 = arith.subf %11, %12 : vector<8x1xf32>
    %16 = math.exp %15 : vector<8x1xf32>
    %17 = arith.addf %14, %16 : vector<8x1xf32>
    %18 = math.log %17 : vector<8x1xf32>
    %19 = arith.addf %12, %18 : vector<8x1xf32>
    %cst_5 = arith.constant 5.000000e-01 : f32
    %20 = vector.broadcast %cst_5 : f32 to vector<8x1xf32>
    %21 = arith.cmpf olt, %1, %20 : vector<8x1xf32>
    %22 = arith.select %21, %6, %11 : vector<8x1xi1>, vector<8x1xf32>
    %23 = arith.subf %19, %22 : vector<8x1xf32>
    %24 = vector.shape_cast %23 : vector<8x1xf32> to vector<1x8x1xf32>
    %cst_6 = arith.constant dense<0.000000e+00> : vector<1xf32>
    %25 = vector.multi_reduction <add>, %24, %cst_6 [1, 2] : vector<1x8x1xf32> to vector<1xf32>
    %26 = vector.shape_cast %25 : vector<1xf32> to vector<1x1x1xf32>
    %27 = vector.extract %26[0, 0, 0] : f32 from vector<1x1x1xf32>
    %cst_7 = arith.constant 1.250000e-01 : f32
    %28 = arith.mulf %27, %cst_7 : f32
    %c0_8 = arith.constant 0 : index
    %c0_9 = arith.constant 0 : index
    %29 = memref.load %arg2[%c0_8, %c0_9] : memref<1x1xf32, #tpu.memory_space<smem>>
    memref.store %28, %arg2[%c0_8, %c0_9] : memref<1x1xf32, #tpu.memory_space<smem>>
    return
  }
}

</mosaic_0001>

<llo_original>
// kernel: tpu_custom_call.1
$region0: #{tpu_custom_call.1}
  #allocation0 [shape = 'u32[]', space=smem, size = 0x4, offset = 0x4, fixed_abs, tag = 'smem constant byte address 0x4 - core index']
  #allocation1 [shape = 'u32[144,128]{1,0:T(1,128)}', space=vmem, size = 0x12000, scoped, tag = 'internal scratch']
  %s0 = inlined_call_operand.hbm [shape: f32[8,12], index: 0, kind: input, shape index: {}]
  %s1 = inlined_call_operand.hbm [shape: f32[2,12], index: 1, kind: input, shape index: {}]
  %s2 = inlined_call_operand.hbm [shape: f32[1,1], index: 2, kind: output, shape index: {}]
  %s3 = sld [smem:[#allocation0]]
  $region26: #{tpu_custom_call.1} parent=0
    _
  %s5 = ssub.s32 1, %s3
  %s6 = scalar_select 0, %s5, %s3
  $region1: #{tpu_custom_call.1} parent=0
    #allocation2 [shape = 'u8[4096]{0}', space=vmem, size = 0x1000, scoped, tag = 'input window, operand 0, single buffered']
    #allocation3 [shape = 's32[1]{0}', space=sflag, size = 0x4, scoped, tag = 'scoped memory for tpu_custom_call.1']
    #allocation4 [shape = 's32[1]{0}', space=sflag, size = 0x4, scoped, tag = 'scoped memory for tpu_custom_call.1']
    #allocation5 [shape = 'u8[1024]{0}', space=vmem, size = 0x400, scoped, tag = 'input window, operand 1, single buffered']
    #allocation6 [shape = 's32[1]{0}', space=sflag, size = 0x4, scoped, tag = 'scoped memory for tpu_custom_call.1']
    #allocation7 [shape = 'u8[512]{0}', space=smem, size = 0x200, scoped, tag = 'output window, operand 0, single buffered']
    %7 = vsyncpa [#allocation3], 0
    %8 = vsyncpa [#allocation6], 0
    %9 = vsyncpa [#allocation4], 0
    // Predicated region
    $region2: #{tpu_custom_call.1} parent=1 // pred_check
      _
    $region3: #{tpu_custom_call.1} parent=1 // pred_check_branch
      %11 = sbr.rel (0) target = $region5
    $region4: #{tpu_custom_call.1} parent=1 // pred_region
      %s13 = ssub.s32 128, 128
      %14 = vsyncadd [#allocation3], %s13
      %s16 = sshll.u32 [#allocation2], 4
      %s17 = int_to_ptr.vmem [resolvable:$true] %s16
      %19 = dma.hbm_to_vmem [thread:$0]  %s0, 128, %s17, [#allocation3]
    $region5: #{tpu_custom_call.1} parent=1 // pred_fallthru
      _
    // Predicated region
    $region6: #{tpu_custom_call.1} parent=1 // pred_check
      _
    $region7: #{tpu_custom_call.1} parent=1 // pred_check_branch
      %21 = sbr.rel (0) target = $region9
    $region8: #{tpu_custom_call.1} parent=1 // pred_region
      %s23 = ssub.s32 32, 32
      %24 = vsyncadd [#allocation6], %s23
      %s26 = sshll.u32 [#allocation5], 4
      %s27 = int_to_ptr.vmem [resolvable:$true] %s26
      %29 = dma.hbm_to_vmem [thread:$0]  %s1, 32, %s27, [#allocation6]
    $region9: #{tpu_custom_call.1} parent=1 // pred_fallthru
      _
    // Predicated region
    $region10: #{tpu_custom_call.1} parent=1 // pred_check
      _
    $region11: #{tpu_custom_call.1} parent=1 // pred_check_branch
      %31 = sbr.rel (0) target = $region13
    $region12: #{tpu_custom_call.1} parent=1 // pred_region
      %32 = dma.done [#allocation3], 128
    $region13: #{tpu_custom_call.1} parent=1 // pred_fallthru
      _
    // Predicated region
    $region14: #{tpu_custom_call.1} parent=1 // pred_check
      _
    $region15: #{tpu_custom_call.1} parent=1 // pred_check_branch
      %34 = sbr.rel (0) target = $region17
    $region16: #{tpu_custom_call.1} parent=1 // pred_region
      %35 = dma.done [#allocation6], 32
    $region17: #{tpu_custom_call.1} parent=1 // pred_fallthru
      _
    %v36 = vld [vmem:[#allocation2] sm:$0xff]
    %v37 = vld [vmem:[#allocation5] sm:$0x1]
    %v38 = vlaneseq
    %v39 = vshrl.u32 %v38, 7
    %v40 = vsub.s32 0, %v39
    %v41 = vrot.slane %v37, %v40
    %v42 = vmul.f32 %v36, %v41
    %vm43 = vcmask 97280
    %v44 = vsel %vm43, %v42, 0.0
    %45 = vadd.xlane.f32.xlu0 %v44
    %v46 = vpop.xlane.xlu0 %45
    %v47 = vld [vmem:[#allocation5 + $0x1] sm:$0x1]
    %v48 = vlaneseq
    %v49 = vshrl.u32 %v48, 7
    %v50 = vsub.s32 0, %v49
    %v51 = vrot.slane %v47, %v50
    %v52 = vmul.f32 %v36, %v51
    %v53 = vsel %vm43, %v52, 0.0
    %54 = vadd.xlane.f32.xlu0 %v53
    %v55 = vpop.xlane.xlu0 %54
    %v56 = vmax.f32 %v46, %v55
    %v57 = vsub.f32 %v46, %v56
    %v58 = vmul.f32 %v57, 1.442695
    %v59 = vpow.pop %v58
    %v60 = vsub.f32 %v55, %v56
    %v61 = vmul.f32 %v60, 1.442695
    %v62 = vpow.pop %v61
    %v63 = vadd.f32 %v59, %v62
    %v64 = vlog2.pop %v63
    %v65 = vmul.f32 %v64, 0.6931472
    %v66 = vadd.f32 %v56, %v65
    %vm67 = vcmp.lt.f32.partialorder %v36, 0.5
    %v68 = vsel %vm67, %v46, %v55
    %v69 = vsub.f32 %v66, %v68
    %71 = vrot.lane.b32.xlu0 %v69, 117
    %v72 = vpop.permute.xlu0 %71
    %vm74 = vcmask 7168
    %v75 = vsel %vm74, %v72, 0.0
    %76 = vadd.xlane.f32.xlu0 %v75
    %v77 = vpop.xlane.xlu0 %76
    %v78 = vrot.slane %v77, 4
    %v79 = vadd.f32 %v77, %v78
    %v80 = vrot.slane %v79, 2
    %v81 = vadd.f32 %v79, %v80
    %v82 = vrot.slane %v81, 1
    %v83 = vadd.f32 %v81, %v82
    %s84 = vtos %v83
    %s85 = smul.f32 %s84, 0.125
    %s86 = scalar_lea.smem [#allocation7], 0
    %87 = sst [smem:[%s86]] %s85
    // Predicated region
    $region18: #{tpu_custom_call.1} parent=1 // pred_check
      _
    $region19: #{tpu_custom_call.1} parent=1 // pred_check_branch
      %89 = sbr.rel (0) target = $region21
    $region20: #{tpu_custom_call.1} parent=1 // pred_region
      %s91 = ssub.s32 16, 16
      %92 = vsyncadd [#allocation4], %s91
      %95 = dma.smem_to_hbm [#allocation7], 16, %s2, [#allocation4]
    $region21: #{tpu_custom_call.1} parent=1 // pred_fallthru
      _
    // Predicated region
    $region22: #{tpu_custom_call.1} parent=1 // pred_check
      _
    $region23: #{tpu_custom_call.1} parent=1 // pred_check_branch
      %97 = sbr.rel (0) target = $region25
    $region24: #{tpu_custom_call.1} parent=1 // pred_region
      %98 = dma.done [#allocation4], 16
    $region25: #{tpu_custom_call.1} parent=1 // pred_fallthru
      _
    %99 = sfence
    %100 = vsyncpa [#allocation3], 1
    %101 = vsyncpa [#allocation6], 1
    %102 = vsyncpa [#allocation4], 1

</llo_original>
